<compile_context>
chip_gen: v5e
topology: v5e:2x2
jax: 0.10.0
libtpu: 0.0.40
codegen_flags: <defaults>
</compile_context>

<pallas_src>
import functools

import jax
import jax.numpy as jnp
from jax.experimental import pallas as pl
from jax.experimental.pallas import tpu as pltpu


# --------------------------------------------------------------------------------------
# Kernel 1: spatially tiled avg/max pooling + shared FC + sigmoid -> per-channel scale
# --------------------------------------------------------------------------------------
def _ca_pool_fc_kernel(x_ref, w1_ref, w2_ref, s_ref, sum_acc, max_acc, *, inv_hw):
    """x_ref: (1, C, TS) tile of x.  w1: (hid, C), w2: (C, hid)  (PyTorch Linear layout).
    s_ref: (1, C, 1) per-image sigmoid scale (written on the last spatial tile).
    sum_acc / max_acc: (C, 1) f32 VMEM scratch accumulators."""
    si = pl.program_id(1)

    xt = x_ref[0].astype(jnp.float32)                  # (C, TS)
    tile_sum = jnp.sum(xt, axis=-1, keepdims=True)     # (C, 1)  lane-reduce (XLU)
    tile_max = jnp.max(xt, axis=-1, keepdims=True)     # (C, 1)

    @pl.when(si == 0)
    def _():
        sum_acc[...] = tile_sum
        max_acc[...] = tile_max

    @pl.when(si > 0)
    def _():
        sum_acc[...] = sum_acc[...] + tile_sum
        max_acc[...] = jnp.maximum(max_acc[...], tile_max)

    @pl.when(si == pl.num_programs(1) - 1)
    def _():
        c = w2_ref.shape[0]
        # Stack [avg | max] as two lane-columns of one (C, 2) operand so the shared
        # MLP runs once (one pair of dots) instead of two separate passes.
        col = jax.lax.broadcasted_iota(jnp.int32, (c, 2), 1)
        pooled = jnp.where(col == 0, sum_acc[...] * inv_hw, max_acc[...])      # (C, 2)
        h = jnp.maximum(
            jnp.dot(w1_ref[...], pooled, preferred_element_type=jnp.float32),
            0.0)                                                               # (hid, 2)
        logits2 = jnp.dot(w2_ref[...], h, preferred_element_type=jnp.float32)  # (C, 2)
        logits = logits2[:, 0:1] + logits2[:, 1:2]                             # (C, 1)
        s_ref[...] = jax.nn.sigmoid(logits)[None]                              # (1, C, 1)


# --------------------------------------------------------------------------------------
# Kernel 2: broadcast rescale  out = x * scale  (per-channel scale, lane-dense tiles)
# --------------------------------------------------------------------------------------
def _ca_scale_kernel(x_ref, s_ref, o_ref):
    o_ref[...] = (x_ref[...].astype(jnp.float32) * s_ref[...]).astype(o_ref.dtype)


# --------------------------------------------------------------------------------------
# Tiling helper + wrapper
# --------------------------------------------------------------------------------------
def _pick_spatial_tile(hw, c, target_bytes=2 * 1024 * 1024):
    """Largest multiple-of-128 divisor of hw whose f32 tile (C, TS) stays under
    ~target_bytes, so double-buffered in+out tiles fit every gen's scoped VMEM."""
    max_cols = max(128, target_bytes // (4 * c))
    if hw <= max_cols:
        return hw
    best = None
    ts = 128
    while ts <= max_cols:
        if hw % ts == 0:
            best = ts
        ts += 128
    return best if best is not None else hw  # full-extent block is always legal


def channel_attention(x_nchw, w1, w2, *, spatial_tile=None,
                      vmem_limit_bytes=32 * 1024 * 1024):
    """x_nchw: (N, C, H, W).  w1: (C//r, C) = fc[0].weight,  w2: (C, C//r) = fc[2].weight
    (both bias=False, exactly as in the PyTorch reference)."""
    n, c, h, w = x_nchw.shape
    hw = h * w
    hidden = w1.shape[0]
    assert w1.shape == (hidden, c) and w2.shape == (c, hidden)

    x = x_nchw.reshape(n, c, hw)  # free reshape; stays NCHW-contiguous in HBM

    ts = spatial_tile if spatial_tile is not None else _pick_spatial_tile(hw, c)
    assert hw % ts == 0, (hw, ts)
    nt = hw // ts

    # Pass 1: tiled reduction -> (N, C, 1) sigmoid scale (FC fused into last tile).
    scale = pl.pallas_call(
        functools.partial(_ca_pool_fc_kernel, inv_hw=1.0 / float(hw)),
        out_shape=jax.ShapeDtypeStruct((n, c, 1), jnp.float32),
        grid=(n, nt),
        in_specs=[
            pl.BlockSpec((1, c, ts), lambda i, s: (i, 0, s)),
            pl.BlockSpec((hidden, c), lambda i, s: (0, 0)),
            pl.BlockSpec((c, hidden), lambda i, s: (0, 0)),
        ],
        out_specs=pl.BlockSpec((1, c, 1), lambda i, s: (i, 0, 0)),
        scratch_shapes=[pltpu.VMEM((c, 1), jnp.float32),
                        pltpu.VMEM((c, 1), jnp.float32)],
        compiler_params=pltpu.CompilerParams(
            dimension_semantics=("parallel", "arbitrary"),
            vmem_limit_bytes=vmem_limit_bytes),
    )(x, w1, w2)

    # Pass 2: tiled rescale x * scale (fully parallel grid, lane-dense stores).
    y = pl.pallas_call(
        _ca_scale_kernel,
        out_shape=jax.ShapeDtypeStruct((n, c, hw), x_nchw.dtype),
        grid=(n, nt),
        in_specs=[
            pl.BlockSpec((1, c, ts), lambda i, s: (i, 0, s)),
            pl.BlockSpec((1, c, 1), lambda i, s: (i, 0, 0)),
        ],
        out_specs=pl.BlockSpec((1, c, ts), lambda i, s: (i, 0, s)),
        compiler_params=pltpu.CompilerParams(
            dimension_semantics=("parallel", "parallel"),
            vmem_limit_bytes=vmem_limit_bytes),
    )(x, scale)

    return y.reshape(n, c, h, w)


# --------------------------------------------------------------------------------------
# Pure-JAX reference (mirrors the PyTorch module exactly)
# --------------------------------------------------------------------------------------
def channel_attention_ref(x, w1, w2):
    avg = jnp.mean(x, axis=(2, 3))   # (N, C)
    mx = jnp.max(x, axis=(2, 3))     # (N, C)

    def fc(v):  # Linear(bias=False) -> ReLU -> Linear(bias=False), torch layout
        return jnp.maximum(v @ w1.T, 0.0) @ w2.T

    s = jax.nn.sigmoid(fc(avg) + fc(mx))
    return x * s[:, :, None, None]


if __name__ == "__main__":
    key = jax.random.PRNGKey(0)
    kx, k1, k2 = jax.random.split(key, 3)

    # Small shapes consistent with the module (ESRGAN uses C=64, reduction=16).
    N, C, H, W = 2, 64, 16, 16
    reduction = 16
    hidden = C // reduction

    x = jax.random.normal(kx, (N, C, H, W), jnp.float32)
    w1 = jax.random.normal(k1, (hidden, C), jnp.float32) * 0.1   # fc[0].weight (bias=False)
    w2 = jax.random.normal(k2, (C, hidden), jnp.float32) * 0.1   # fc[2].weight (bias=False)

    # spatial_tile=128 -> 2 spatial tiles per image: exercises the tiled accumulator path.
    fwd = jax.jit(functools.partial(channel_attention, spatial_tile=128))
    y = fwd(x, w1, w2)
    jax.block_until_ready(y)

    y_ref = channel_attention_ref(x, w1, w2)
    assert y.shape == x.shape, y.shape
    assert bool(jnp.all(jnp.isfinite(y)))
    max_err = float(jnp.max(jnp.abs(y - y_ref)))
    assert max_err < 2e-2, max_err
    print("KERNEL_OK")
</pallas_src>

<mosaic_0001>
module attributes {stable_mosaic.version = 11 : i64} {
  func.func @_ca_scale_kernel(%arg0: i32, %arg1: i32, %arg2: memref<1x64x128xf32, #tpu.memory_space<vmem>>, %arg3: memref<1x64x1xf32, #tpu.memory_space<vmem>>, %arg4: memref<1x64x128xf32, #tpu.memory_space<vmem>>) attributes {dimension_semantics = [#tpu.dimension_semantics<parallel>, #tpu.dimension_semantics<parallel>], iteration_bounds = array<i64: 2, 2>, scalar_prefetch = 0 : i64, scratch_operands = 0 : i64, tpu.core_type = #tpu.core_type<tc>, window_params = [{transform_indices = @transform_0, window_bounds = array<i64: 1, 64, 128>}, {transform_indices = @transform_1, window_bounds = array<i64: 1, 64, 1>}, {transform_indices = @transform_2, window_bounds = array<i64: 1, 64, 128>}]} {
    %c0 = arith.constant 0 : index
    %c0_0 = arith.constant 0 : index
    %c0_1 = arith.constant 0 : index
    %0 = vector.load %arg2[%c0, %c0_0, %c0_1] : memref<1x64x128xf32, #tpu.memory_space<vmem>>, vector<1x64x128xf32>
    %c0_2 = arith.constant 0 : index
    %c0_3 = arith.constant 0 : index
    %c0_4 = arith.constant 0 : index
    %1 = vector.load %arg3[%c0_2, %c0_3, %c0_4] : memref<1x64x1xf32, #tpu.memory_space<vmem>>, vector<1x64x1xf32>
    %2 = vector.broadcast %1 : vector<1x64x1xf32> to vector<1x64x128xf32>
    %3 = arith.mulf %0, %2 : vector<1x64x128xf32>
    %c0_5 = arith.constant 0 : index
    %c0_6 = arith.constant 0 : index
    %c0_7 = arith.constant 0 : index
    %4 = vector.load %arg4[%c0_5, %c0_6, %c0_7] : memref<1x64x128xf32, #tpu.memory_space<vmem>>, vector<1x64x128xf32>
    tpu.vector_store %arg4[%c0_5, %c0_6, %c0_7], %3 {strides = array<i32>} : memref<1x64x128xf32, #tpu.memory_space<vmem>>, vector<1x64x128xf32>,
    return
  }
  func.func @transform_0(%arg0: i32, %arg1: i32) -> (i32, i32, i32) {
    %c0_i32 = arith.constant 0 : i32
    %c0_i32_0 = arith.constant 0 : i32
    return %arg0, %c0_i32, %arg1 : i32, i32, i32
  }
  func.func @transform_1(%arg0: i32, %arg1: i32) -> (i32, i32, i32) {
    %c0_i32 = arith.constant 0 : i32
    %c0_i32_0 = arith.constant 0 : i32
    %c0_i32_1 = arith.constant 0 : i32
    return %arg0, %c0_i32, %c0_i32_0 : i32, i32, i32
  }
  func.func @transform_2(%arg0: i32, %arg1: i32) -> (i32, i32, i32) {
    %c0_i32 = arith.constant 0 : i32
    %c0_i32_0 = arith.constant 0 : i32
    return %arg0, %c0_i32, %arg1 : i32, i32, i32
  }
}

module attributes {stable_mosaic.version = 11 : i64} {
  func.func @_ca_pool_fc_kernel(%arg0: i32, %arg1: i32, %arg2: memref<1x64x128xf32, #tpu.memory_space<vmem>>, %arg3: memref<4x64xf32, #tpu.memory_space<vmem>>, %arg4: memref<64x4xf32, #tpu.memory_space<vmem>>, %arg5: memref<1x64x1xf32, #tpu.memory_space<vmem>>, %arg6: memref<64x1xf32, #tpu.memory_space<vmem>>, %arg7: memref<64x1xf32, #tpu.memory_space<vmem>>) attributes {dimension_semantics = [#tpu.dimension_semantics<parallel>, #tpu.dimension_semantics<arbitrary>], iteration_bounds = array<i64: 2, 2>, scalar_prefetch = 0 : i64, scratch_operands = 2 : i64, tpu.core_type = #tpu.core_type<tc>, window_params = [{transform_indices = @transform_0, window_bounds = array<i64: 1, 64, 128>}, {pipeline_mode = #tpu.pipeline_mode<synchronous>, transform_indices = @transform_1, window_bounds = array<i64: 4, 64>}, {pipeline_mode = #tpu.pipeline_mode<synchronous>, transform_indices = @transform_2, window_bounds = array<i64: 64, 4>}, {transform_indices = @transform_3, window_bounds = array<i64: 1, 64, 1>}]} {
    %c0 = arith.constant 0 : index
    %c0_0 = arith.constant 0 : index
    %c0_1 = arith.constant 0 : index
    %0 = vector.load %arg2[%c0, %c0_0, %c0_1] : memref<1x64x128xf32, #tpu.memory_space<vmem>>, vector<1x64x128xf32>
    %1 = vector.shape_cast %0 : vector<1x64x128xf32> to vector<64x128xf32>
    %cst = arith.constant dense<0.000000e+00> : vector<64xf32>
    %2 = vector.multi_reduction <add>, %1, %cst [1] : vector<64x128xf32> to vector<64xf32>
    %3 = vector.shape_cast %2 : vector<64xf32> to vector<64x1xf32>
    %cst_2 = arith.constant dense<0xFF800000> : vector<64xf32>
    %4 = vector.multi_reduction <maximumf>, %1, %cst_2 [1] : vector<64x128xf32> to vector<64xf32>
    %5 = vector.shape_cast %4 : vector<64xf32> to vector<64x1xf32>
    %c0_i32 = arith.constant 0 : i32
    %6 = arith.cmpi eq, %arg1, %c0_i32 : i32
    %7 = arith.extui %6 : i1 to i32
    %c0_i32_3 = arith.constant 0 : i32
    %8 = arith.cmpi ne, %7, %c0_i32_3 : i32
    scf.if %8 {
      %c0_7 = arith.constant 0 : index
      %c0_8 = arith.constant 0 : index
      %15 = vector.load %arg6[%c0_7, %c0_8] : memref<64x1xf32, #tpu.memory_space<vmem>>, vector<64x1xf32>
      tpu.vector_store %arg6[%c0_7, %c0_8], %3 {strides = array<i32>} : memref<64x1xf32, #tpu.memory_space<vmem>>, vector<64x1xf32>,
      %c0_9 = arith.constant 0 : index
      %c0_10 = arith.constant 0 : index
      %16 = vector.load %arg7[%c0_9, %c0_10] : memref<64x1xf32, #tpu.memory_space<vmem>>, vector<64x1xf32>
      tpu.vector_store %arg7[%c0_9, %c0_10], %5 {strides = array<i32>} : memref<64x1xf32, #tpu.memory_space<vmem>>, vector<64x1xf32>,
    } else {
    }
    %c0_i32_4 = arith.constant 0 : i32
    %9 = arith.cmpi sgt, %arg1, %c0_i32_4 : i32
    %10 = arith.extui %9 : i1 to i32
    %c0_i32_5 = arith.constant 0 : i32
    %11 = arith.cmpi ne, %10, %c0_i32_5 : i32
    scf.if %11 {
      %c0_7 = arith.constant 0 : index
      %c0_8 = arith.constant 0 : index
      %15 = vector.load %arg6[%c0_7, %c0_8] : memref<64x1xf32, #tpu.memory_space<vmem>>, vector<64x1xf32>
      %16 = arith.addf %15, %3 : vector<64x1xf32>
      %c0_9 = arith.constant 0 : index
      %c0_10 = arith.constant 0 : index
      %17 = vector.load %arg6[%c0_9, %c0_10] : memref<64x1xf32, #tpu.memory_space<vmem>>, vector<64x1xf32>
      tpu.vector_store %arg6[%c0_9, %c0_10], %16 {strides = array<i32>} : memref<64x1xf32, #tpu.memory_space<vmem>>, vector<64x1xf32>,
      %c0_11 = arith.constant 0 : index
      %c0_12 = arith.constant 0 : index
      %18 = vector.load %arg7[%c0_11, %c0_12] : memref<64x1xf32, #tpu.memory_space<vmem>>, vector<64x1xf32>
      %19 = arith.maximumf %18, %5 : vector<64x1xf32>
      %c0_13 = arith.constant 0 : index
      %c0_14 = arith.constant 0 : index
      %20 = vector.load %arg7[%c0_13, %c0_14] : memref<64x1xf32, #tpu.memory_space<vmem>>, vector<64x1xf32>
      tpu.vector_store %arg7[%c0_13, %c0_14], %19 {strides = array<i32>} : memref<64x1xf32, #tpu.memory_space<vmem>>, vector<64x1xf32>,
    } else {
    }
    %c1_i32 = arith.constant 1 : i32
    %12 = arith.cmpi eq, %arg1, %c1_i32 : i32
    %13 = arith.extui %12 : i1 to i32
    %c0_i32_6 = arith.constant 0 : i32
    %14 = arith.cmpi ne, %13, %c0_i32_6 : i32
    scf.if %14 {
      %15 = tpu.iota {dimensions = array<i32: 1>} : vector<64x2xi32>
      %c0_i32_7 = arith.constant 0 : i32
      %16 = vector.broadcast %c0_i32_7 : i32 to vector<64x2xi32>
      %17 = arith.cmpi eq, %15, %16 : vector<64x2xi32>
      %c0_8 = arith.constant 0 : index
      %c0_9 = arith.constant 0 : index
      %18 = vector.load %arg6[%c0_8, %c0_9] : memref<64x1xf32, #tpu.memory_space<vmem>>, vector<64x1xf32>
      %cst_10 = arith.constant 3.906250e-03 : f32
      %19 = vector.broadcast %cst_10 : f32 to vector<64x1xf32>
      %20 = arith.mulf %18, %19 : vector<64x1xf32>
      %c0_11 = arith.constant 0 : index
      %c0_12 = arith.constant 0 : index
      %21 = vector.load %arg7[%c0_11, %c0_12] : memref<64x1xf32, #tpu.memory_space<vmem>>, vector<64x1xf32>
      %22 = vector.shape_cast %20 : vector<64x1xf32> to vector<64x1xf32>
      %23 = vector.broadcast %22 : vector<64x1xf32> to vector<64x2xf32>
      %24 = vector.shape_cast %21 : vector<64x1xf32> to vector<64x1xf32>
      %25 = vector.broadcast %24 : vector<64x1xf32> to vector<64x2xf32>
      %26 = arith.select %17, %23, %25 : vector<64x2xi1>, vector<64x2xf32>
      %c0_13 = arith.constant 0 : index
      %c0_14 = arith.constant 0 : index
      %27 = vector.load %arg3[%c0_13, %c0_14] : memref<4x64xf32, #tpu.memory_space<vmem>>, vector<4x64xf32>
      %cst_15 = arith.constant dense<0.000000e+00> : vector<4x2xf32>
      %28 = tpu.matmul %27, %26, %cst_15 {dimension_numbers = #tpu.dot_dimension_numbers<[1], [0], [0], [1], [0, 0, 1, 1], [], []>} : vector<4x64xf32>, vector<64x2xf32>, vector<4x2xf32> -> vector<4x2xf32>
      %cst_16 = arith.constant 0.000000e+00 : f32
      %29 = vector.broadcast %cst_16 : f32 to vector<4x2xf32>
      %30 = arith.maximumf %28, %29 : vector<4x2xf32>
      %c0_17 = arith.constant 0 : index
      %c0_18 = arith.constant 0 : index
      %31 = vector.load %arg4[%c0_17, %c0_18] : memref<64x4xf32, #tpu.memory_space<vmem>>, vector<64x4xf32>
      %cst_19 = arith.constant dense<0.000000e+00> : vector<64x2xf32>
      %32 = tpu.matmul %31, %30, %cst_19 {dimension_numbers = #tpu.dot_dimension_numbers<[1], [0], [0], [1], [0, 0, 1, 1], [], []>} : vector<64x4xf32>, vector<4x2xf32>, vector<64x2xf32> -> vector<64x2xf32>
      %33 = vector.extract_strided_slice %32 {offsets = [0, 0], sizes = [64, 1], strides = [1, 1]} : vector<64x2xf32> to vector<64x1xf32>
      %34 = vector.extract_strided_slice %32 {offsets = [0, 1], sizes = [64, 1], strides = [1, 1]} : vector<64x2xf32> to vector<64x1xf32>
      %35 = arith.addf %33, %34 : vector<64x1xf32>
      %36 = arith.negf %35 : vector<64x1xf32>
      %37 = math.exp %36 : vector<64x1xf32>
      %cst_20 = arith.constant 1.000000e+00 : f32
      %38 = vector.broadcast %cst_20 : f32 to vector<64x1xf32>
      %39 = arith.addf %38, %37 : vector<64x1xf32>
      %40 = arith.divf %38, %39 : vector<64x1xf32>
      %41 = vector.shape_cast %40 : vector<64x1xf32> to vector<1x64x1xf32>
      %c0_21 = arith.constant 0 : index
      %c0_22 = arith.constant 0 : index
      %c0_23 = arith.constant 0 : index
      %42 = vector.load %arg5[%c0_21, %c0_22, %c0_23] : memref<1x64x1xf32, #tpu.memory_space<vmem>>, vector<1x64x1xf32>
      tpu.vector_store %arg5[%c0_21, %c0_22, %c0_23], %41 {strides = array<i32>} : memref<1x64x1xf32, #tpu.memory_space<vmem>>, vector<1x64x1xf32>,
    } else {
    }
    return
  }
  func.func @transform_0(%arg0: i32, %arg1: i32) -> (i32, i32, i32) {
    %c0_i32 = arith.constant 0 : i32
    %c0_i32_0 = arith.constant 0 : i32
    return %arg0, %c0_i32, %arg1 : i32, i32, i32
  }
  func.func @transform_1(%arg0: i32, %arg1: i32) -> (i32, i32) {
    %c0_i32 = arith.constant 0 : i32
    %c0_i32_0 = arith.constant 0 : i32
    %c0_i32_1 = arith.constant 0 : i32
    return %c0_i32, %c0_i32_0 : i32, i32
  }
  func.func @transform_2(%arg0: i32, %arg1: i32) -> (i32, i32) {
    %c0_i32 = arith.constant 0 : i32
    %c0_i32_0 = arith.constant 0 : i32
    %c0_i32_1 = arith.constant 0 : i32
    return %c0_i32, %c0_i32_0 : i32, i32
  }
  func.func @transform_3(%arg0: i32, %arg1: i32) -> (i32, i32, i32) {
    %c0_i32 = arith.constant 0 : i32
    %c0_i32_0 = arith.constant 0 : i32
    %c0_i32_1 = arith.constant 0 : i32
    return %arg0, %c0_i32, %c0_i32_0 : i32, i32, i32
  }
}

</mosaic_0001>

<llo_original>
// kernel: channel_attention.3
$region0: #{channel_attention.3}
  #allocation0 [shape = 'u32[]', space=smem, size = 0x4, offset = 0x4, fixed_abs, tag = 'smem constant byte address 0x4 - core index']
  #allocation1 [shape = 'u32[72,128]{1,0:T(1,128)}', space=vmem, size = 0x9000, scoped, tag = 'internal scratch']
  %s0 = inlined_call_operand.vmem [shape: f32[2,64,256], index: 0, kind: input, shape index: {}]
  %s1 = inlined_call_operand.vmem [shape: f32[2,64,1], index: 1, kind: input, shape index: {}]
  %s2 = inlined_call_operand.vmem [shape: f32[2,64,256], index: 2, kind: output, shape index: {}]
  %s3 = sld [smem:[#allocation0]]
  $region113: #{channel_attention.3} parent=0
    _
  %s5 = ssub.s32 1, %s3
  %s6 = scalar_select 0, %s5, %s3
  $region1: #{channel_attention.3} parent=0
    #allocation2 [shape = 'u8[65536]{0}', space=vmem, size = 0x10000, scoped, tag = 'input window, operand 0']
    #allocation3 [shape = 'u8[65536]{0}', space=vmem, size = 0x10000, scoped, tag = 'output window, operand 0']
    loop: start=0, step=1, limit=6
    $region2: #{channel_attention.3} parent=1 // loop_pre_header
      _
    $region3: #{channel_attention.3} parent=1 // loop_header
      %s8 = sphi 0, %s12
      %p9 = scmp.ge.s32.totalorder %s8, 6
      %s15 = sphi 0, %s27
      %s16 = sphi 0, %s23
      %s17 = sphi 0, %s15
      %s18 = sphi 0, %s16
      %s19 = sphi 0, %s17
      %s20 = sphi 0, %s18
      %s32 = sphi 0, %s34
      %s35 = sphi 0, %s32
      %s36 = sphi 0, %s35
      %s52 = sphi 0, %s36
      %s58 = sphi 0, %s60
      %s61 = sphi 0, %s58
      %s62 = sphi 0, %s61
      %s78 = sphi 0, %s62
      %s86 = sphi 0, %s88
      %s89 = sphi 0, %s86
      %s90 = sphi 0, %s89
      %s106 = sphi 0, %s90
    $region4: #{channel_attention.3} parent=1 // loop_header_branch
      %11 = sbr.rel (%p9) target = $region8
    $region5: #{channel_attention.3} parent=1 // loop_body
      %s13 = ssub.s32 %s8, 1
      %s14 = ssub.s32 %s8, 2
      %s21 = sadd.s32 1, %s16
      %p22 = scmp.ge.s32.totalorder %s21, 2
      %s23 = scalar_select %p22, 0, %s21
      %s24 = sadd.s32 1, %s15
      %s25 = scalar_select %p22, %s24, %s15
      %p26 = scmp.ge.s32.totalorder %s25, 2
      %s27 = scalar_select %p26, 0, %s25
      %s28 = ssub.s32 %s15, %s27
      %s29 = ssub.s32 %s16, %s23
      %s30 = sor.u32 %s28, %s29
      %p31 = scmp.eq.s32.totalorder %s30, 0
      %s33 = sadd.s32 %s32, 1
      %s34 = scalar_select %p31, %s32, %s33
      %p37 = pneg %p31
      %p38 = scmp.eq.s32.totalorder %s8, 3
      %p39 = por %p37, %p38
      %p40 = scmp.ne.s32.totalorder %s32, %s35
      %p41 = scmp.eq.s32.totalorder %s8, 0
      %p42 = por %p40, %p41
      %p43 = scmp.ne.s32.totalorder %s32, %s35
      %p44 = scmp.eq.s32.totalorder %s13, 3
      %p45 = por %p43, %p44
      %p46 = scmp.ne.s32.totalorder %s35, %s36
      %p47 = scmp.eq.s32.totalorder %s13, 0
      %p48 = por %p46, %p47
      %p49 = scmp.ne.s32.totalorder %s35, %s36
      %p50 = scmp.eq.s32.totalorder %s14, 3
      %p51 = por %p49, %p50
      %p53 = scmp.ne.s32.totalorder %s36, %s52
      %p54 = scmp.eq.s32.totalorder %s14, 0
      %p55 = por %p53, %p54
      %s56 = ssub.s32 %s15, %s27
      %p57 = scmp.eq.s32.totalorder %s56, 0
      %s59 = sadd.s32 %s58, 1
      %s60 = scalar_select %p57, %s58, %s59
      %p63 = pneg %p57
      %p64 = scmp.eq.s32.totalorder %s8, 3
      %p65 = por %p63, %p64
      %p66 = scmp.ne.s32.totalorder %s58, %s61
      %p67 = scmp.eq.s32.totalorder %s8, 0
      %p68 = por %p66, %p67
      %p69 = scmp.ne.s32.totalorder %s58, %s61
      %p70 = scmp.eq.s32.totalorder %s13, 3
      %p71 = por %p69, %p70
      %p72 = scmp.ne.s32.totalorder %s61, %s62
      %p73 = scmp.eq.s32.totalorder %s13, 0
      %p74 = por %p72, %p73
      %p75 = scmp.ne.s32.totalorder %s61, %s62
      %p76 = scmp.eq.s32.totalorder %s14, 3
      %p77 = por %p75, %p76
      %p79 = scmp.ne.s32.totalorder %s62, %s78
      %p80 = scmp.eq.s32.totalorder %s14, 0
      %p81 = por %p79, %p80
      %s82 = ssub.s32 %s15, %s27
      %s83 = ssub.s32 %s16, %s23
      %s84 = sor.u32 %s82, %s83
      %p85 = scmp.eq.s32.totalorder %s84, 0
      %s87 = sadd.s32 %s86, 1
      %s88 = scalar_select %p85, %s86, %s87
      %p91 = pneg %p85
      %p92 = scmp.eq.s32.totalorder %s8, 3
      %p93 = por %p91, %p92
      %p94 = scmp.ne.s32.totalorder %s86, %s89
      %p95 = scmp.eq.s32.totalorder %s8, 0
      %p96 = por %p94, %p95
      %p97 = scmp.ne.s32.totalorder %s86, %s89
      %p98 = scmp.eq.s32.totalorder %s13, 3
      %p99 = por %p97, %p98
      %p100 = scmp.ne.s32.totalorder %s89, %s90
      %p101 = scmp.eq.s32.totalorder %s13, 0
      %p102 = por %p100, %p101
      %p103 = scmp.ne.s32.totalorder %s89, %s90
      %p104 = scmp.eq.s32.totalorder %s14, 3
      %p105 = por %p103, %p104
      %p107 = scmp.ne.s32.totalorder %s90, %s106
      %p108 = scmp.eq.s32.totalorder %s14, 0
      %p109 = por %p107, %p108
      %p110 = scmp.le.s32.totalorder 1, %s8
      %p111 = scmp.lt.s32.totalorder %s8, 5
      %p112 = pnand %p110, %p111
      %p113 = pneg %p112
      // Predicated region
      $region9: #{channel_attention.3} parent=5 // pred_check
        _
      $region10: #{channel_attention.3} parent=5 // pred_check_branch
        %115 = sbr.rel (%p112) target = $region12
      $region11: #{channel_attention.3} parent=5 // pred_region
        %s116 = ssub.s32 %s8, 1
      $region12: #{channel_attention.3} parent=5 // pred_fallthru
        _
      %p117 = scmp.lt.s32.totalorder %s8, 4
      // Predicated region
      $region13: #{channel_attention.3} parent=5 // pred_check
        %p118 = pneg %p117
      $region14: #{channel_attention.3} parent=5 // pred_check_branch
        %120 = sbr.rel (%p118) target = $region16
      $region15: #{channel_attention.3} parent=5 // pred_region
        // Predicated region
        $region17: #{channel_attention.3} parent=15 // pred_check
          %p121 = pneg %p42
        $region18: #{channel_attention.3} parent=15 // pred_check_branch
          %123 = sbr.rel (%p121) target = $region20
        $region19: #{channel_attention.3} parent=15 // pred_region
          %s124 = sand.u32 %s32, 1
          %s125 = sand.u32 %s32, 1
          %s126 = smul.addr %s125, 64
          %s127 = scalar_lea.vmem [#allocation2], %s126
          %s128 = smul.addr %s15, 16
          %s129 = sadd.s32 %s16, %s128
          %s130 = smul.addr %s129, 8
          %s131 = scalar_lea.vmem %s0, %s130
          // Predicated region
          $region21: #{channel_attention.3} parent=19 // pred_check
            _
          $region22: #{channel_attention.3} parent=19 // pred_check_branch
            %133 = sbr.rel (0) target = $region24
          $region23: #{channel_attention.3} parent=19 // pred_region
            // Predicated region
            $region25: #{channel_attention.3} parent=23 // pred_check
              _
            $region26: #{channel_attention.3} parent=23 // pred_check_branch
              %135 = sbr.rel (0) target = $region28
            $region27: #{channel_attention.3} parent=23 // pred_region
              // Predicated region
              $region40: #{channel_attention.3} parent=27 // pred_check
                _
              $region41: #{channel_attention.3} parent=27 // pred_check_branch
                %165 = sbr.rel (0) target = $region43
              $region42: #{channel_attention.3} parent=27 // pred_region
                loop: start=0, step=1, limit=1
                $region44: #{channel_attention.3} parent=42 // loop_pre_header
                  _
                $region45: #{channel_attention.3} parent=42 // loop_header
                  %s167 = sphi 0, %s171
                  %p168 = scmp.ge.s32.totalorder %s167, 1
                  %s172 = sphi %s131, %s131
                  %s173 = sphi %s127, %s127
                $region46: #{channel_attention.3} parent=42 // loop_header_branch
                  %170 = sbr.rel (%p168) target = $region50
                $region47: #{channel_attention.3} parent=42 // loop_body
                  %v174 = vld [vmem:[%s172] sm:$0xff]
                  %175 = vst [vmem:[%s173] sm:$0xff] %v174
                  %v176 = vld [vmem:[%s172 + $0x10] sm:$0xff]
                  %177 = vst [vmem:[%s173 + $0x8] sm:$0xff] %v176
                  %v178 = vld [vmem:[%s172 + $0x20] sm:$0xff]
                  %179 = vst [vmem:[%s173 + $0x10] sm:$0xff] %v178
                  %v180 = vld [vmem:[%s172 + $0x30] sm:$0xff]
                  %181 = vst [vmem:[%s173 + $0x18] sm:$0xff] %v180
                  %v182 = vld [vmem:[%s172 + $0x40] sm:$0xff]
                  %183 = vst [vmem:[%s173 + $0x20] sm:$0xff] %v182
                  %v184 = vld [vmem:[%s172 + $0x50] sm:$0xff]
                  %185 = vst [vmem:[%s173 + $0x28] sm:$0xff] %v184
                  %v186 = vld [vmem:[%s172 + $0x60] sm:$0xff]
                  %187 = vst [vmem:[%s173 + $0x30] sm:$0xff] %v186
                  %v188 = vld [vmem:[%s172 + $0x70] sm:$0xff]
                  %189 = vst [vmem:[%s173 + $0x38] sm:$0xff] %v188
                $region48: #{channel_attention.3} parent=42 // loop_footer
                  %s171 = sadd.s32 1, %s167
                $region49: #{channel_attention.3} parent=42 // loop_footer_branch
                  %166 = sbr.rel target = $region45
                $region50: #{channel_attention.3} parent=42 // loop_exit
                  _
              $region43: #{channel_attention.3} parent=27 // pred_fallthru
                _
              // Predicated region
              $region51: #{channel_attention.3} parent=27 // pred_check
                _
              $region52: #{channel_attention.3} parent=27 // pred_check_branch
                %191 = sbr.rel target = $region54
              $region53: #{channel_attention.3} parent=27 // pred_region
                _
              $region54: #{channel_attention.3} parent=27 // pred_fallthru
                _
            $region28: #{channel_attention.3} parent=23 // pred_fallthru
              _
            // Predicated region
            $region29: #{channel_attention.3} parent=23 // pred_check
              _
            $region30: #{channel_attention.3} parent=23 // pred_check_branch
              %137 = sbr.rel target = $region32
            $region31: #{channel_attention.3} parent=23 // pred_region
              %s139 = ssub.s32 256, 1
              loop: start=0, step=1, limit=1
              $region33: #{channel_attention.3} parent=31 // loop_pre_header
                _
              $region34: #{channel_attention.3} parent=31 // loop_header
                %s141 = sphi 0, %s145
                %p142 = scmp.ge.s32.totalorder %s141, 1
                %s146 = sphi %s131, %s131
                %s147 = sphi %s127, %s127
              $region35: #{channel_attention.3} parent=31 // loop_header_branch
                %144 = sbr.rel (%p142) target = $region39
              $region36: #{channel_attention.3} parent=31 // loop_body
                %v148 = vld [vmem:[%s146] sm:%s139]
                %149 = vst [vmem:[%s147] sm:%s139] %v148
                %v150 = vld [vmem:[%s146 + $0x10] sm:%s139]
                %151 = vst [vmem:[%s147 + $0x8] sm:%s139] %v150
                %v152 = vld [vmem:[%s146 + $0x20] sm:%s139]
                %153 = vst [vmem:[%s147 + $0x10] sm:%s139] %v152
                %v154 = vld [vmem:[%s146 + $0x30] sm:%s139]
                %155 = vst [vmem:[%s147 + $0x18] sm:%s139] %v154
                %v156 = vld [vmem:[%s146 + $0x40] sm:%s139]
                %157 = vst [vmem:[%s147 + $0x20] sm:%s139] %v156
                %v158 = vld [vmem:[%s146 + $0x50] sm:%s139]
                %159 = vst [vmem:[%s147 + $0x28] sm:%s139] %v158
                %v160 = vld [vmem:[%s146 + $0x60] sm:%s139]
                %161 = vst [vmem:[%s147 + $0x30] sm:%s139] %v160
                %v162 = vld [vmem:[%s146 + $0x70] sm:%s139]
                %163 = vst [vmem:[%s147 + $0x38] sm:%s139] %v162
              $region37: #{channel_attention.3} parent=31 // loop_footer
                %s145 = sadd.s32 1, %s141
              $region38: #{channel_attention.3} parent=31 // loop_footer_branch
                %140 = sbr.rel target = $region34
              $region39: #{channel_attention.3} parent=31 // loop_exit
                _
            $region32: #{channel_attention.3} parent=23 // pred_fallthru
              _
          $region24: #{channel_attention.3} parent=19 // pred_fallthru
            _
          %192 = vnop
        $region20: #{channel_attention.3} parent=15 // pred_fallthru
          _
        // Predicated region
        $region55: #{channel_attention.3} parent=15 // pred_check
          %p193 = pneg %p68
        $region56: #{channel_attention.3} parent=15 // pred_check_branch
          %195 = sbr.rel (%p193) target = $region58
        $region57: #{channel_attention.3} parent=15 // pred_region
          %p196 = scmp.lt.s32.totalorder %s15, 1
          %s197 = scalar_select %p196, %s15, 1
          %s198 = smul.addr %s197, 8
          %s199 = smul.addr %s198, 8
          %s200 = scalar_lea.vmem %s1, %s199
        $region58: #{channel_attention.3} parent=15 // pred_fallthru
          _
      $region16: #{channel_attention.3} parent=5 // pred_fallthru
        _
      %p201 = scmp.le.s32.totalorder 1, %s8
      %p202 = scmp.lt.s32.totalorder %s8, 5
      %p203 = pnand %p201, %p202
      %p204 = pneg %p203
      // Predicated region
      $region59: #{channel_attention.3} parent=5 // pred_check
        _
      $region60: #{channel_attention.3} parent=5 // pred_check_branch
        %206 = sbr.rel (%p203) target = $region62
      $region61: #{channel_attention.3} parent=5 // pred_region
        %s207 = ssub.s32 %s8, 1
        %s208 = sand.u32 %s35, 1
        %s209 = sand.u32 %s35, 1
        %s210 = smul.addr %s209, 64
        %s211 = scalar_lea.vmem [#allocation2], %s210
        // Predicated region
        $region63: #{channel_attention.3} parent=61 // pred_check
          %p212 = pneg %p48
        $region64: #{channel_attention.3} parent=61 // pred_check_branch
          %214 = sbr.rel (%p212) target = $region66
        $region65: #{channel_attention.3} parent=61 // pred_region
          _
        $region66: #{channel_attention.3} parent=61 // pred_fallthru
          _
        %s215 = sand.u32 %s35, 1
        %s216 = sand.u32 %s35, 1
        %s217 = smul.addr %s216, 64
        %s218 = scalar_lea.vmem [#allocation2], %s217
        %p219 = pneg %p48
        %p220 = pneg %p45
        %p221 = scmp.lt.s32.totalorder %s17, 1
        %s222 = scalar_select %p221, %s17, 1
        %s223 = smul.addr %s222, 8
        %s224 = smul.addr %s223, 8
        %s225 = scalar_lea.vmem %s1, %s224
        %p226 = pneg %p74
        %p227 = pneg %p71
        %p228 = pneg %p102
        %p229 = pneg %p99
        %s230 = sand.u32 %s89, 1
        %s231 = sand.u32 %s89, 1
        %s232 = smul.addr %s231, 64
        %s233 = scalar_lea.vmem [#allocation3], %s232
        %p234 = scmp.lt.s32.totalorder %s17, 1
        %s235 = scalar_select %p234, %s17, 1
        %s236 = smul.addr %s235, 8
        %s237 = smul.addr %s236, 8
        %s238 = scalar_lea.vmem %s1, %s237
        %v239 = vld [vmem:[%s211] sm:$0xff]
        %v240 = vld [vmem:[%s211 + $0x8] sm:$0xff]
        %v241 = vld [vmem:[%s211 + $0x10] sm:$0xff]
        %v242 = vld [vmem:[%s211 + $0x18] sm:$0xff]
        %v243 = vld [vmem:[%s211 + $0x20] sm:$0xff]
        %v244 = vld [vmem:[%s211 + $0x28] sm:$0xff]
        %v245 = vld [vmem:[%s211 + $0x30] sm:$0xff]
        %v246 = vld [vmem:[%s211 + $0x38] sm:$0xff]
        %v247 = vld [vmem:[%s238] sm:$0xff]
        %v248 = vld [vmem:[%s238 + $0x8] sm:$0xff]
        %v249 = vld [vmem:[%s238 + $0x10] sm:$0xff]
        %v250 = vld [vmem:[%s238 + $0x18] sm:$0xff]
        %v251 = vld [vmem:[%s238 + $0x20] sm:$0xff]
        %v252 = vld [vmem:[%s238 + $0x28] sm:$0xff]
        %v253 = vld [vmem:[%s238 + $0x30] sm:$0xff]
        %v254 = vld [vmem:[%s238 + $0x38] sm:$0xff]
        %256 = vset.pattern.permute.xlu0 0
        %257 = vperm.xlu0 %256, %v247
        %v258 = vpop.permute.xlu0 %257
        %261 = vset.pattern.permute.xlu0 0
        %262 = vperm.xlu0 %261, %v248
        %v263 = vpop.permute.xlu0 %262
        %266 = vset.pattern.permute.xlu0 0
        %267 = vperm.xlu0 %266, %v249
        %v268 = vpop.permute.xlu0 %267
        %271 = vset.pattern.permute.xlu0 0
        %272 = vperm.xlu0 %271, %v250
        %v273 = vpop.permute.xlu0 %272
        %276 = vset.pattern.permute.xlu0 0
        %277 = vperm.xlu0 %276, %v251
        %v278 = vpop.permute.xlu0 %277
        %281 = vset.pattern.permute.xlu0 0
        %282 = vperm.xlu0 %281, %v252
        %v283 = vpop.permute.xlu0 %282
        %286 = vset.pattern.permute.xlu0 0
        %287 = vperm.xlu0 %286, %v253
        %v288 = vpop.permute.xlu0 %287
        %291 = vset.pattern.permute.xlu0 0
        %292 = vperm.xlu0 %291, %v254
        %v293 = vpop.permute.xlu0 %292
        %v295 = vmul.f32 %v239, %v258
        %v296 = vmul.f32 %v240, %v263
        %v297 = vmul.f32 %v241, %v268
        %v298 = vmul.f32 %v242, %v273
        %v299 = vmul.f32 %v243, %v278
        %v300 = vmul.f32 %v244, %v283
        %v301 = vmul.f32 %v245, %v288
        %v302 = vmul.f32 %v246, %v293
        %303 = vst [vmem:[%s233] sm:$0xff] %v295
        %304 = vst [vmem:[%s233 + $0x8] sm:$0xff] %v296
        %305 = vst [vmem:[%s233 + $0x10] sm:$0xff] %v297
        %306 = vst [vmem:[%s233 + $0x18] sm:$0xff] %v298
        %307 = vst [vmem:[%s233 + $0x20] sm:$0xff] %v299
        %308 = vst [vmem:[%s233 + $0x28] sm:$0xff] %v300
        %309 = vst [vmem:[%s233 + $0x30] sm:$0xff] %v301
        %310 = vst [vmem:[%s233 + $0x38] sm:$0xff] %v302
        %s311 = sand.u32 %s89, 1
        %s312 = sand.u32 %s89, 1
        %s313 = smul.addr %s312, 64
        %s314 = scalar_lea.vmem [#allocation3], %s313
        // Predicated region
        $region67: #{channel_attention.3} parent=61 // pred_check
          %p315 = pneg %p99
        $region68: #{channel_attention.3} parent=61 // pred_check_branch
          %317 = sbr.rel (%p315) target = $region70
        $region69: #{channel_attention.3} parent=61 // pred_region
          %s318 = smul.addr %s17, 16
          %s319 = sadd.s32 %s18, %s318
          %s320 = smul.addr %s319, 8
          %s321 = scalar_lea.vmem %s2, %s320
          // Predicated region
          $region71: #{channel_attention.3} parent=69 // pred_check
            _
          $region72: #{channel_attention.3} parent=69 // pred_check_branch
            %323 = sbr.rel (0) target = $region74
          $region73: #{channel_attention.3} parent=69 // pred_region
            // Predicated region
            $region75: #{channel_attention.3} parent=73 // pred_check
              _
            $region76: #{channel_attention.3} parent=73 // pred_check_branch
              %325 = sbr.rel (0) target = $region78
            $region77: #{channel_attention.3} parent=73 // pred_region
              // Predicated region
              $region90: #{channel_attention.3} parent=77 // pred_check
                _
              $region91: #{channel_attention.3} parent=77 // pred_check_branch
                %355 = sbr.rel (0) target = $region93
              $region92: #{channel_attention.3} parent=77 // pred_region
                loop: start=0, step=1, limit=1
                $region94: #{channel_attention.3} parent=92 // loop_pre_header
                  _
                $region95: #{channel_attention.3} parent=92 // loop_header
                  %s357 = sphi 0, %s361
                  %p358 = scmp.ge.s32.totalorder %s357, 1
                  %s362 = sphi %s314, %s314
                  %s363 = sphi %s321, %s321
                $region96: #{channel_attention.3} parent=92 // loop_header_branch
                  %360 = sbr.rel (%p358) target = $region100
                $region97: #{channel_attention.3} parent=92 // loop_body
                  %v364 = vld [vmem:[%s362] sm:$0xff]
                  %365 = vst [vmem:[%s363] sm:$0xff] %v364
                  %v366 = vld [vmem:[%s362 + $0x8] sm:$0xff]
                  %367 = vst [vmem:[%s363 + $0x10] sm:$0xff] %v366
                  %v368 = vld [vmem:[%s362 + $0x10] sm:$0xff]
                  %369 = vst [vmem:[%s363 + $0x20] sm:$0xff] %v368
                  %v370 = vld [vmem:[%s362 + $0x18] sm:$0xff]
                  %371 = vst [vmem:[%s363 + $0x30] sm:$0xff] %v370
                  %v372 = vld [vmem:[%s362 + $0x20] sm:$0xff]
                  %373 = vst [vmem:[%s363 + $0x40] sm:$0xff] %v372
                  %v374 = vld [vmem:[%s362 + $0x28] sm:$0xff]
                  %375 = vst [vmem:[%s363 + $0x50] sm:$0xff] %v374
                  %v376 = vld [vmem:[%s362 + $0x30] sm:$0xff]
                  %377 = vst [vmem:[%s363 + $0x60] sm:$0xff] %v376
                  %v378 = vld [vmem:[%s362 + $0x38] sm:$0xff]
                  %379 = vst [vmem:[%s363 + $0x70] sm:$0xff] %v378
                $region98: #{channel_attention.3} parent=92 // loop_footer
                  %s361 = sadd.s32 1, %s357
                $region99: #{channel_attention.3} parent=92 // loop_footer_branch
                  %356 = sbr.rel target = $region95
                $region100: #{channel_attention.3} parent=92 // loop_exit
                  _
              $region93: #{channel_attention.3} parent=77 // pred_fallthru
                _
              // Predicated region
              $region101: #{channel_attention.3} parent=77 // pred_check
                _
              $region102: #{channel_attention.3} parent=77 // pred_check_branch
                %381 = sbr.rel target = $region104
              $region103: #{channel_attention.3} parent=77 // pred_region
                _
              $region104: #{channel_attention.3} parent=77 // pred_fallthru
                _
            $region78: #{channel_attention.3} parent=73 // pred_fallthru
              _
            // Predicated region
            $region79: #{channel_attention.3} parent=73 // pred_check
              _
            $region80: #{channel_attention.3} parent=73 // pred_check_branch
              %327 = sbr.rel target = $region82
            $region81: #{channel_attention.3} parent=73 // pred_region
              %s329 = ssub.s32 256, 1
              loop: start=0, step=1, limit=1
              $region83: #{channel_attention.3} parent=81 // loop_pre_header
                _
              $region84: #{channel_attention.3} parent=81 // loop_header
                %s331 = sphi 0, %s335
                %p332 = scmp.ge.s32.totalorder %s331, 1
                %s336 = sphi %s314, %s314
                %s337 = sphi %s321, %s321
              $region85: #{channel_attention.3} parent=81 // loop_header_branch
                %334 = sbr.rel (%p332) target = $region89
              $region86: #{channel_attention.3} parent=81 // loop_body
                %v338 = vld [vmem:[%s336] sm:%s329]
                %339 = vst [vmem:[%s337] sm:%s329] %v338
                %v340 = vld [vmem:[%s336 + $0x8] sm:%s329]
                %341 = vst [vmem:[%s337 + $0x10] sm:%s329] %v340
                %v342 = vld [vmem:[%s336 + $0x10] sm:%s329]
                %343 = vst [vmem:[%s337 + $0x20] sm:%s329] %v342
                %v344 = vld [vmem:[%s336 + $0x18] sm:%s329]
                %345 = vst [vmem:[%s337 + $0x30] sm:%s329] %v344
                %v346 = vld [vmem:[%s336 + $0x20] sm:%s329]
                %347 = vst [vmem:[%s337 + $0x40] sm:%s329] %v346
                %v348 = vld [vmem:[%s336 + $0x28] sm:%s329]
                %349 = vst [vmem:[%s337 + $0x50] sm:%s329] %v348
                %v350 = vld [vmem:[%s336 + $0x30] sm:%s329]
                %351 = vst [vmem:[%s337 + $0x60] sm:%s329] %v350
                %v352 = vld [vmem:[%s336 + $0x38] sm:%s329]
                %353 = vst [vmem:[%s337 + $0x70] sm:%s329] %v352
              $region87: #{channel_attention.3} parent=81 // loop_footer
                %s335 = sadd.s32 1, %s331
              $region88: #{channel_attention.3} parent=81 // loop_footer_branch
                %330 = sbr.rel target = $region84
              $region89: #{channel_attention.3} parent=81 // loop_exit
                _
            $region82: #{channel_attention.3} parent=73 // pred_fallthru
              _
          $region74: #{channel_attention.3} parent=69 // pred_fallthru
            _
          %382 = vnop
        $region70: #{channel_attention.3} parent=61 // pred_fallthru
          _
      $region62: #{channel_attention.3} parent=5 // pred_fallthru
        _
      %p383 = scmp.le.s32.totalorder 2, %s8
      // Predicated region
      $region105: #{channel_attention.3} parent=5 // pred_check
        %p384 = pneg %p383
      $region106: #{channel_attention.3} parent=5 // pred_check_branch
        %386 = sbr.rel (%p384) target = $region108
      $region107: #{channel_attention.3} parent=5 // pred_region
        %s387 = ssub.s32 %s8, 2
        // Predicated region
        $region109: #{channel_attention.3} parent=107 // pred_check
          %p388 = pneg %p105
        $region110: #{channel_attention.3} parent=107 // pred_check_branch
          %390 = sbr.rel (%p388) target = $region112
        $region111: #{channel_attention.3} parent=107 // pred_region
          %s391 = sand.u32 %s90, 1
          %s392 = sand.u32 %s90, 1
          %s393 = smul.addr %s392, 64
          %s394 = scalar_lea.vmem [#allocation3], %s393
        $region112: #{channel_attention.3} parent=107 // pred_fallthru
          _
      $region108: #{channel_attention.3} parent=5 // pred_fallthru
        _
    $region6: #{channel_attention.3} parent=1 // loop_footer
      %s12 = sadd.s32 1, %s8
    $region7: #{channel_attention.3} parent=1 // loop_footer_branch
      %7 = sbr.rel target = $region3
    $region8: #{channel_attention.3} parent=1 // loop_exit
      _

// kernel: channel_attention.2
$region0: #{channel_attention.2}
  #allocation0 [shape = 'u32[]', space=smem, size = 0x4, offset = 0x4, fixed_abs, tag = 'smem constant byte address 0x4 - core index']
  #allocation1 [shape = 'u32[72,128]{1,0:T(1,128)}', space=vmem, size = 0x9000, scoped, tag = 'internal scratch']
  #allocation2 [shape = 'f32[64,1]{1,0:T(8,128)}', space=vmem, size = 0x8000, scoped, tag = 'scratch operand']
  #allocation3 [shape = 'f32[64,1]{1,0:T(8,128)}', space=vmem, size = 0x8000, scoped, tag = 'scratch operand']
  %s0 = inlined_call_operand.vmem [shape: f32[2,64,256], index: 0, kind: input, shape index: {}]
  %s1 = inlined_call_operand.vmem [shape: f32[4,64], index: 1, kind: input, shape index: {}]
  %s2 = inlined_call_operand.vmem [shape: f32[64,4], index: 2, kind: input, shape index: {}]
  %s3 = inlined_call_operand.vmem [shape: f32[2,64,1], index: 3, kind: output, shape index: {}]
  %s4 = sld [smem:[#allocation0]]
  $region95: #{channel_attention.2} parent=0
    _
  %s6 = ssub.s32 1, %s4
  %s7 = scalar_select 0, %s6, %s4
  $region1: #{channel_attention.2} parent=0
    #allocation4 [shape = 'u8[65536]{0}', space=vmem, size = 0x10000, scoped, tag = 'input window, operand 0']
    loop: start=0, step=1, limit=6
    $region2: #{channel_attention.2} parent=1 // loop_pre_header
      _
    $region3: #{channel_attention.2} parent=1 // loop_header
      %s9 = sphi 0, %s13
      %p10 = scmp.ge.s32.totalorder %s9, 6
      %s16 = sphi 0, %s28
      %s17 = sphi 0, %s24
      %s18 = sphi 0, %s16
      %s19 = sphi 0, %s17
      %s20 = sphi 0, %s18
      %s21 = sphi 0, %s19
      %s33 = sphi 0, %s35
      %s36 = sphi 0, %s33
      %s37 = sphi 0, %s36
      %s53 = sphi 0, %s37
      %s57 = sphi 0, %s57
      %s59 = sphi 0, %s57
      %s60 = sphi 0, %s59
      %s74 = sphi 0, %s60
      %s78 = sphi 0, %s78
      %s80 = sphi 0, %s78
      %s81 = sphi 0, %s80
      %s95 = sphi 0, %s81
      %s101 = sphi 0, %s103
      %s104 = sphi 0, %s101
      %s105 = sphi 0, %s104
      %s121 = sphi 0, %s105
    $region4: #{channel_attention.2} parent=1 // loop_header_branch
      %12 = sbr.rel (%p10) target = $region8
    $region5: #{channel_attention.2} parent=1 // loop_body
      %s14 = ssub.s32 %s9, 1
      %s15 = ssub.s32 %s9, 2
      %s22 = sadd.s32 1, %s17
      %p23 = scmp.ge.s32.totalorder %s22, 2
      %s24 = scalar_select %p23, 0, %s22
      %s25 = sadd.s32 1, %s16
      %s26 = scalar_select %p23, %s25, %s16
      %p27 = scmp.ge.s32.totalorder %s26, 2
      %s28 = scalar_select %p27, 0, %s26
      %s29 = ssub.s32 %s16, %s28
      %s30 = ssub.s32 %s17, %s24
      %s31 = sor.u32 %s29, %s30
      %p32 = scmp.eq.s32.totalorder %s31, 0
      %s34 = sadd.s32 %s33, 1
      %s35 = scalar_select %p32, %s33, %s34
      %p38 = pneg %p32
      %p39 = scmp.eq.s32.totalorder %s9, 3
      %p40 = por %p38, %p39
      %p41 = scmp.ne.s32.totalorder %s33, %s36
      %p42 = scmp.eq.s32.totalorder %s9, 0
      %p43 = por %p41, %p42
      %p44 = scmp.ne.s32.totalorder %s33, %s36
      %p45 = scmp.eq.s32.totalorder %s14, 3
      %p46 = por %p44, %p45
      %p47 = scmp.ne.s32.totalorder %s36, %s37
      %p48 = scmp.eq.s32.totalorder %s14, 0
      %p49 = por %p47, %p48
      %p50 = scmp.ne.s32.totalorder %s36, %s37
      %p51 = scmp.eq.s32.totalorder %s15, 3
      %p52 = por %p50, %p51
      %p54 = scmp.ne.s32.totalorder %s37, %s53
      %p55 = scmp.eq.s32.totalorder %s15, 0
      %p56 = por %p54, %p55
      %s58 = sadd.s32 %s57, 1
      %p61 = scmp.eq.s32.totalorder %s9, 3
      %p62 = scmp.ne.s32.totalorder %s57, %s59
      %p63 = scmp.eq.s32.totalorder %s9, 0
      %p64 = por %p62, %p63
      %p65 = scmp.ne.s32.totalorder %s57, %s59
      %p66 = scmp.eq.s32.totalorder %s14, 3
      %p67 = por %p65, %p66
      %p68 = scmp.ne.s32.totalorder %s59, %s60
      %p69 = scmp.eq.s32.totalorder %s14, 0
      %p70 = por %p68, %p69
      %p71 = scmp.ne.s32.totalorder %s59, %s60
      %p72 = scmp.eq.s32.totalorder %s15, 3
      %p73 = por %p71, %p72
      %p75 = scmp.ne.s32.totalorder %s60, %s74
      %p76 = scmp.eq.s32.totalorder %s15, 0
      %p77 = por %p75, %p76
      %s79 = sadd.s32 %s78, 1
      %p82 = scmp.eq.s32.totalorder %s9, 3
      %p83 = scmp.ne.s32.totalorder %s78, %s80
      %p84 = scmp.eq.s32.totalorder %s9, 0
      %p85 = por %p83, %p84
      %p86 = scmp.ne.s32.totalorder %s78, %s80
      %p87 = scmp.eq.s32.totalorder %s14, 3
      %p88 = por %p86, %p87
      %p89 = scmp.ne.s32.totalorder %s80, %s81
      %p90 = scmp.eq.s32.totalorder %s14, 0
      %p91 = por %p89, %p90
      %p92 = scmp.ne.s32.totalorder %s80, %s81
      %p93 = scmp.eq.s32.totalorder %s15, 3
      %p94 = por %p92, %p93
      %p96 = scmp.ne.s32.totalorder %s81, %s95
      %p97 = scmp.eq.s32.totalorder %s15, 0
      %p98 = por %p96, %p97
      %s99 = ssub.s32 %s16, %s28
      %p100 = scmp.eq.s32.totalorder %s99, 0
      %s102 = sadd.s32 %s101, 1
      %s103 = scalar_select %p100, %s101, %s102
      %p106 = pneg %p100
      %p107 = scmp.eq.s32.totalorder %s9, 3
      %p108 = por %p106, %p107
      %p109 = scmp.ne.s32.totalorder %s101, %s104
      %p110 = scmp.eq.s32.totalorder %s9, 0
      %p111 = por %p109, %p110
      %p112 = scmp.ne.s32.totalorder %s101, %s104
      %p113 = scmp.eq.s32.totalorder %s14, 3
      %p114 = por %p112, %p113
      %p115 = scmp.ne.s32.totalorder %s104, %s105
      %p116 = scmp.eq.s32.totalorder %s14, 0
      %p117 = por %p115, %p116
      %p118 = scmp.ne.s32.totalorder %s104, %s105
      %p119 = scmp.eq.s32.totalorder %s15, 3
      %p120 = por %p118, %p119
      %p122 = scmp.ne.s32.totalorder %s105, %s121
      %p123 = scmp.eq.s32.totalorder %s15, 0
      %p124 = por %p122, %p123
      %p125 = scmp.le.s32.totalorder 1, %s9
      %p126 = scmp.lt.s32.totalorder %s9, 5
      %p127 = pnand %p125, %p126
      %p128 = pneg %p127
      // Predicated region
      $region9: #{channel_attention.2} parent=5 // pred_check
        _
      $region10: #{channel_attention.2} parent=5 // pred_check_branch
        %130 = sbr.rel (%p127) target = $region12
      $region11: #{channel_attention.2} parent=5 // pred_region
        %s131 = ssub.s32 %s9, 1
        // Predicated region
        $region13: #{channel_attention.2} parent=11 // pred_check
          %p132 = pneg %p70
        $region14: #{channel_attention.2} parent=11 // pred_check_branch
          %134 = sbr.rel (%p132) target = $region16
        $region15: #{channel_attention.2} parent=11 // pred_region
          _
        $region16: #{channel_attention.2} parent=11 // pred_fallthru
          _
        // Predicated region
        $region17: #{channel_attention.2} parent=11 // pred_check
          %p135 = pneg %p91
        $region18: #{channel_attention.2} parent=11 // pred_check_branch
          %137 = sbr.rel (%p135) target = $region20
        $region19: #{channel_attention.2} parent=11 // pred_region
          _
        $region20: #{channel_attention.2} parent=11 // pred_fallthru
          _
      $region12: #{channel_attention.2} parent=5 // pred_fallthru
        _
      %p138 = scmp.lt.s32.totalorder %s9, 4
      // Predicated region
      $region21: #{channel_attention.2} parent=5 // pred_check
        %p139 = pneg %p138
      $region22: #{channel_attention.2} parent=5 // pred_check_branch
        %141 = sbr.rel (%p139) target = $region24
      $region23: #{channel_attention.2} parent=5 // pred_region
        // Predicated region
        $region25: #{channel_attention.2} parent=23 // pred_check
          %p142 = pneg %p43
        $region26: #{channel_attention.2} parent=23 // pred_check_branch
          %144 = sbr.rel (%p142) target = $region28
        $region27: #{channel_attention.2} parent=23 // pred_region
          %s145 = sand.u32 %s33, 1
          %s146 = sand.u32 %s33, 1
          %s147 = smul.addr %s146, 64
          %s148 = scalar_lea.vmem [#allocation4], %s147
          %s149 = smul.addr %s16, 16
          %s150 = sadd.s32 %s17, %s149
          %s151 = smul.addr %s150, 8
          %s152 = scalar_lea.vmem %s0, %s151
          // Predicated region
          $region29: #{channel_attention.2} parent=27 // pred_check
            _
          $region30: #{channel_attention.2} parent=27 // pred_check_branch
            %154 = sbr.rel (0) target = $region32
          $region31: #{channel_attention.2} parent=27 // pred_region
            // Predicated region
            $region33: #{channel_attention.2} parent=31 // pred_check
              _
            $region34: #{channel_attention.2} parent=31 // pred_check_branch
              %156 = sbr.rel (0) target = $region36
            $region35: #{channel_attention.2} parent=31 // pred_region
              // Predicated region
              $region48: #{channel_attention.2} parent=35 // pred_check
                _
              $region49: #{channel_attention.2} parent=35 // pred_check_branch
                %186 = sbr.rel (0) target = $region51
              $region50: #{channel_attention.2} parent=35 // pred_region
                loop: start=0, step=1, limit=1
                $region52: #{channel_attention.2} parent=50 // loop_pre_header
                  _
                $region53: #{channel_attention.2} parent=50 // loop_header
                  %s188 = sphi 0, %s192
                  %p189 = scmp.ge.s32.totalorder %s188, 1
                  %s193 = sphi %s152, %s152
                  %s194 = sphi %s148, %s148
                $region54: #{channel_attention.2} parent=50 // loop_header_branch
                  %191 = sbr.rel (%p189) target = $region58
                $region55: #{channel_attention.2} parent=50 // loop_body
                  %v195 = vld [vmem:[%s193] sm:$0xff]
                  %196 = vst [vmem:[%s194] sm:$0xff] %v195
                  %v197 = vld [vmem:[%s193 + $0x10] sm:$0xff]
                  %198 = vst [vmem:[%s194 + $0x8] sm:$0xff] %v197
                  %v199 = vld [vmem:[%s193 + $0x20] sm:$0xff]
                  %200 = vst [vmem:[%s194 + $0x10] sm:$0xff] %v199
                  %v201 = vld [vmem:[%s193 + $0x30] sm:$0xff]
                  %202 = vst [vmem:[%s194 + $0x18] sm:$0xff] %v201
                  %v203 = vld [vmem:[%s193 + $0x40] sm:$0xff]
                  %204 = vst [vmem:[%s194 + $0x20] sm:$0xff] %v203
                  %v205 = vld [vmem:[%s193 + $0x50] sm:$0xff]
                  %206 = vst [vmem:[%s194 + $0x28] sm:$0xff] %v205
                  %v207 = vld [vmem:[%s193 + $0x60] sm:$0xff]
                  %208 = vst [vmem:[%s194 + $0x30] sm:$0xff] %v207
                  %v209 = vld [vmem:[%s193 + $0x70] sm:$0xff]
                  %210 = vst [vmem:[%s194 + $0x38] sm:$0xff] %v209
                $region56: #{channel_attention.2} parent=50 // loop_footer
                  %s192 = sadd.s32 1, %s188
                $region57: #{channel_attention.2} parent=50 // loop_footer_branch
                  %187 = sbr.rel target = $region53
                $region58: #{channel_attention.2} parent=50 // loop_exit
                  _
              $region51: #{channel_attention.2} parent=35 // pred_fallthru
                _
              // Predicated region
              $region59: #{channel_attention.2} parent=35 // pred_check
                _
              $region60: #{channel_attention.2} parent=35 // pred_check_branch
                %212 = sbr.rel target = $region62
              $region61: #{channel_attention.2} parent=35 // pred_region
                _
              $region62: #{channel_attention.2} parent=35 // pred_fallthru
                _
            $region36: #{channel_attention.2} parent=31 // pred_fallthru
              _
            // Predicated region
            $region37: #{channel_attention.2} parent=31 // pred_check
              _
            $region38: #{channel_attention.2} parent=31 // pred_check_branch
              %158 = sbr.rel target = $region40
            $region39: #{channel_attention.2} parent=31 // pred_region
              %s160 = ssub.s32 256, 1
              loop: start=0, step=1, limit=1
              $region41: #{channel_attention.2} parent=39 // loop_pre_header
                _
              $region42: #{channel_attention.2} parent=39 // loop_header
                %s162 = sphi 0, %s166
                %p163 = scmp.ge.s32.totalorder %s162, 1
                %s167 = sphi %s152, %s152
                %s168 = sphi %s148, %s148
              $region43: #{channel_attention.2} parent=39 // loop_header_branch
                %165 = sbr.rel (%p163) target = $region47
              $region44: #{channel_attention.2} parent=39 // loop_body
                %v169 = vld [vmem:[%s167] sm:%s160]
                %170 = vst [vmem:[%s168] sm:%s160] %v169
                %v171 = vld [vmem:[%s167 + $0x10] sm:%s160]
                %172 = vst [vmem:[%s168 + $0x8] sm:%s160] %v171
                %v173 = vld [vmem:[%s167 + $0x20] sm:%s160]
                %174 = vst [vmem:[%s168 + $0x10] sm:%s160] %v173
                %v175 = vld [vmem:[%s167 + $0x30] sm:%s160]
                %176 = vst [vmem:[%s168 + $0x18] sm:%s160] %v175
                %v177 = vld [vmem:[%s167 + $0x40] sm:%s160]
                %178 = vst [vmem:[%s168 + $0x20] sm:%s160] %v177
                %v179 = vld [vmem:[%s167 + $0x50] sm:%s160]
                %180 = vst [vmem:[%s168 + $0x28] sm:%s160] %v179
                %v181 = vld [vmem:[%s167 + $0x60] sm:%s160]
                %182 = vst [vmem:[%s168 + $0x30] sm:%s160] %v181
                %v183 = vld [vmem:[%s167 + $0x70] sm:%s160]
                %184 = vst [vmem:[%s168 + $0x38] sm:%s160] %v183
              $region45: #{channel_attention.2} parent=39 // loop_footer
                %s166 = sadd.s32 1, %s162
              $region46: #{channel_attention.2} parent=39 // loop_footer_branch
                %161 = sbr.rel target = $region42
              $region47: #{channel_attention.2} parent=39 // loop_exit
                _
            $region40: #{channel_attention.2} parent=31 // pred_fallthru
              _
          $region32: #{channel_attention.2} parent=27 // pred_fallthru
            _
          %213 = vnop
        $region28: #{channel_attention.2} parent=23 // pred_fallthru
          _
      $region24: #{channel_attention.2} parent=5 // pred_fallthru
        _
      %p214 = scmp.le.s32.totalorder 1, %s9
      %p215 = scmp.lt.s32.totalorder %s9, 5
      %p216 = pnand %p214, %p215
      %p217 = pneg %p216
      // Predicated region
      $region63: #{channel_attention.2} parent=5 // pred_check
        _
      $region64: #{channel_attention.2} parent=5 // pred_check_branch
        %219 = sbr.rel (%p216) target = $region66
      $region65: #{channel_attention.2} parent=5 // pred_region
        %s220 = ssub.s32 %s9, 1
        %s221 = sand.u32 %s36, 1
        %s222 = sand.u32 %s36, 1
        %s223 = smul.addr %s222, 64
        %s224 = scalar_lea.vmem [#allocation4], %s223
        // Predicated region
        $region67: #{channel_attention.2} parent=65 // pred_check
          %p225 = pneg %p49
        $region68: #{channel_attention.2} parent=65 // pred_check_branch
          %227 = sbr.rel (%p225) target = $region70
        $region69: #{channel_attention.2} parent=65 // pred_region
          _
        $region70: #{channel_attention.2} parent=65 // pred_fallthru
          _
        %s228 = sand.u32 %s36, 1
        %s229 = sand.u32 %s36, 1
        %s230 = smul.addr %s229, 64
        %s231 = scalar_lea.vmem [#allocation4], %s230
        %p232 = pneg %p49
        %p233 = pneg %p46
        %p234 = pneg %p70
        %p235 = pneg %p67
        %p236 = pneg %p91
        %p237 = pneg %p88
        %p238 = pneg %p117
        %p239 = pneg %p114
        %p240 = scmp.lt.s32.totalorder %s18, 1
        %s241 = scalar_select %p240, %s18, 1
        %s242 = smul.addr %s241, 8
        %s243 = smul.addr %s242, 8
        %s244 = scalar_lea.vmem %s3, %s243
        %p245 = scmp.lt.s32.totalorder %s18, 1
        %s246 = scalar_select %p245, %s18, 1
        %s247 = smul.addr %s246, 8
        %s248 = smul.addr %s247, 8
        %s249 = scalar_lea.vmem %s3, %s248
        %v250 = vld [vmem:[%s224] sm:$0xff]
        %v251 = vld [vmem:[%s224 + $0x8] sm:$0xff]
        %v252 = vld [vmem:[%s224 + $0x10] sm:$0xff]
        %v253 = vld [vmem:[%s224 + $0x18] sm:$0xff]
        %v254 = vld [vmem:[%s224 + $0x20] sm:$0xff]
        %v255 = vld [vmem:[%s224 + $0x28] sm:$0xff]
        %v256 = vld [vmem:[%s224 + $0x30] sm:$0xff]
        %v257 = vld [vmem:[%s224 + $0x38] sm:$0xff]
        %258 = vadd.xlane.f32.xlu0 %v250
        %v259 = vpop.xlane.xlu0 %258
        %260 = vadd.xlane.f32.xlu0 %v251
        %v261 = vpop.xlane.xlu0 %260
        %262 = vadd.xlane.f32.xlu0 %v252
        %v263 = vpop.xlane.xlu0 %262
        %264 = vadd.xlane.f32.xlu0 %v253
        %v265 = vpop.xlane.xlu0 %264
        %266 = vadd.xlane.f32.xlu0 %v254
        %v267 = vpop.xlane.xlu0 %266
        %268 = vadd.xlane.f32.xlu0 %v255
        %v269 = vpop.xlane.xlu0 %268
        %270 = vadd.xlane.f32.xlu0 %v256
        %v271 = vpop.xlane.xlu0 %270
        %272 = vadd.xlane.f32.xlu0 %v257
        %v273 = vpop.xlane.xlu0 %272
        %274 = vmax.xlane.f32.xlu0 %v250
        %v275 = vpop.xlane.xlu0 %274
        %276 = vmax.xlane.f32.xlu0 %v251
        %v277 = vpop.xlane.xlu0 %276
        %278 = vmax.xlane.f32.xlu0 %v252
        %v279 = vpop.xlane.xlu0 %278
        %280 = vmax.xlane.f32.xlu0 %v253
        %v281 = vpop.xlane.xlu0 %280
        %282 = vmax.xlane.f32.xlu0 %v254
        %v283 = vpop.xlane.xlu0 %282
        %284 = vmax.xlane.f32.xlu0 %v255
        %v285 = vpop.xlane.xlu0 %284
        %286 = vmax.xlane.f32.xlu0 %v256
        %v287 = vpop.xlane.xlu0 %286
        %288 = vmax.xlane.f32.xlu0 %v257
        %v289 = vpop.xlane.xlu0 %288
        %p290 = scmp.eq.s32.totalorder %s19, 0
        // Predicated region
        $region71: #{channel_attention.2} parent=65 // pred_check
          %p291 = pneg %p290
        $region72: #{channel_attention.2} parent=65 // pred_check_branch
          %293 = sbr.rel (%p291) target = $region74
        $region73: #{channel_attention.2} parent=65 // pred_region
          %vm294 = vcmask 7168
          %295 = vst.msk [vmem:[#allocation2] sm:$0xff] %vm294, %v259
          %296 = vst.msk [vmem:[#allocation2 + $0x8] sm:$0xff] %vm294, %v261
          %297 = vst.msk [vmem:[#allocation2 + $0x10] sm:$0xff] %vm294, %v263
          %298 = vst.msk [vmem:[#allocation2 + $0x18] sm:$0xff] %vm294, %v265
          %299 = vst.msk [vmem:[#allocation2 + $0x20] sm:$0xff] %vm294, %v267
          %300 = vst.msk [vmem:[#allocation2 + $0x28] sm:$0xff] %vm294, %v269
          %301 = vst.msk [vmem:[#allocation2 + $0x30] sm:$0xff] %vm294, %v271
          %302 = vst.msk [vmem:[#allocation2 + $0x38] sm:$0xff] %vm294, %v273
          %303 = vst.msk [vmem:[#allocation3] sm:$0xff] %vm294, %v275
          %304 = vst.msk [vmem:[#allocation3 + $0x8] sm:$0xff] %vm294, %v277
          %305 = vst.msk [vmem:[#allocation3 + $0x10] sm:$0xff] %vm294, %v279
          %306 = vst.msk [vmem:[#allocation3 + $0x18] sm:$0xff] %vm294, %v281
          %307 = vst.msk [vmem:[#allocation3 + $0x20] sm:$0xff] %vm294, %v283
          %308 = vst.msk [vmem:[#allocation3 + $0x28] sm:$0xff] %vm294, %v285
          %309 = vst.msk [vmem:[#allocation3 + $0x30] sm:$0xff] %vm294, %v287
          %310 = vst.msk [vmem:[#allocation3 + $0x38] sm:$0xff] %vm294, %v289
        $region74: #{channel_attention.2} parent=65 // pred_fallthru
          _
        %p311 = scmp.gt.s32.totalorder %s19, 0
        // Predicated region
        $region75: #{channel_attention.2} parent=65 // pred_check
          %p312 = pneg %p311
        $region76: #{channel_attention.2} parent=65 // pred_check_branch
          %314 = sbr.rel (%p312) target = $region78
        $region77: #{channel_attention.2} parent=65 // pred_region
          %v315 = vld [vmem:[#allocation2] sm:$0xff]
          %v316 = vld [vmem:[#allocation2 + $0x8] sm:$0xff]
          %v317 = vld [vmem:[#allocation2 + $0x10] sm:$0xff]
          %v318 = vld [vmem:[#allocation2 + $0x18] sm:$0xff]
          %v319 = vld [vmem:[#allocation2 + $0x20] sm:$0xff]
          %v320 = vld [vmem:[#allocation2 + $0x28] sm:$0xff]
          %v321 = vld [vmem:[#allocation2 + $0x30] sm:$0xff]
          %v322 = vld [vmem:[#allocation2 + $0x38] sm:$0xff]
          %v323 = vadd.f32 %v315, %v259
          %v324 = vadd.f32 %v316, %v261
          %v325 = vadd.f32 %v317, %v263
          %v326 = vadd.f32 %v318, %v265
          %v327 = vadd.f32 %v319, %v267
          %v328 = vadd.f32 %v320, %v269
          %v329 = vadd.f32 %v321, %v271
          %v330 = vadd.f32 %v322, %v273
          %vm331 = vcmask 7168
          %332 = vst.msk [vmem:[#allocation2] sm:$0xff] %vm331, %v323
          %333 = vst.msk [vmem:[#allocation2 + $0x8] sm:$0xff] %vm331, %v324
          %334 = vst.msk [vmem:[#allocation2 + $0x10] sm:$0xff] %vm331, %v325
          %335 = vst.msk [vmem:[#allocation2 + $0x18] sm:$0xff] %vm331, %v326
          %336 = vst.msk [vmem:[#allocation2 + $0x20] sm:$0xff] %vm331, %v327
          %337 = vst.msk [vmem:[#allocation2 + $0x28] sm:$0xff] %vm331, %v328
          %338 = vst.msk [vmem:[#allocation2 + $0x30] sm:$0xff] %vm331, %v329
          %339 = vst.msk [vmem:[#allocation2 + $0x38] sm:$0xff] %vm331, %v330
          %v340 = vld [vmem:[#allocation3] sm:$0xff]
          %v341 = vld [vmem:[#allocation3 + $0x8] sm:$0xff]
          %v342 = vld [vmem:[#allocation3 + $0x10] sm:$0xff]
          %v343 = vld [vmem:[#allocation3 + $0x18] sm:$0xff]
          %v344 = vld [vmem:[#allocation3 + $0x20] sm:$0xff]
          %v345 = vld [vmem:[#allocation3 + $0x28] sm:$0xff]
          %v346 = vld [vmem:[#allocation3 + $0x30] sm:$0xff]
          %v347 = vld [vmem:[#allocation3 + $0x38] sm:$0xff]
          %v348 = vmax.f32 %v340, %v275
          %v349 = vmax.f32 %v341, %v277
          %v350 = vmax.f32 %v342, %v279
          %v351 = vmax.f32 %v343, %v281
          %v352 = vmax.f32 %v344, %v283
          %v353 = vmax.f32 %v345, %v285
          %v354 = vmax.f32 %v346, %v287
          %v355 = vmax.f32 %v347, %v289
          %356 = vst.msk [vmem:[#allocation3] sm:$0xff] %vm331, %v348
          %357 = vst.msk [vmem:[#allocation3 + $0x8] sm:$0xff] %vm331, %v349
          %358 = vst.msk [vmem:[#allocation3 + $0x10] sm:$0xff] %vm331, %v350
          %359 = vst.msk [vmem:[#allocation3 + $0x18] sm:$0xff] %vm331, %v351
          %360 = vst.msk [vmem:[#allocation3 + $0x20] sm:$0xff] %vm331, %v352
          %361 = vst.msk [vmem:[#allocation3 + $0x28] sm:$0xff] %vm331, %v353
          %362 = vst.msk [vmem:[#allocation3 + $0x30] sm:$0xff] %vm331, %v354
          %363 = vst.msk [vmem:[#allocation3 + $0x38] sm:$0xff] %vm331, %v355
        $region78: #{channel_attention.2} parent=65 // pred_fallthru
          _
        %p364 = scmp.eq.s32.totalorder %s19, 1
        // Predicated region
        $region79: #{channel_attention.2} parent=65 // pred_check
          %p365 = pneg %p364
        $region80: #{channel_attention.2} parent=65 // pred_check_branch
          %367 = sbr.rel (%p365) target = $region82
        $region81: #{channel_attention.2} parent=65 // pred_region
          %v368 = vlaneseq
          %v369 = vand.u32 %v368, 127
          %vm370 = vcmp.eq.s32.totalorder %v369, 0
          %v371 = vld [vmem:[#allocation2] sm:$0xff]
          %v372 = vld [vmem:[#allocation2 + $0x8] sm:$0xff]
          %v373 = vld [vmem:[#allocation2 + $0x10] sm:$0xff]
          %v374 = vld [vmem:[#allocation2 + $0x18] sm:$0xff]
          %v375 = vld [vmem:[#allocation2 + $0x20] sm:$0xff]
          %v376 = vld [vmem:[#allocation2 + $0x28] sm:$0xff]
          %v377 = vld [vmem:[#allocation2 + $0x30] sm:$0xff]
          %v378 = vld [vmem:[#allocation2 + $0x38] sm:$0xff]
          %v379 = vmul.f32 %v371, 0.00390625
          %v380 = vmul.f32 %v372, 0.00390625
          %v381 = vmul.f32 %v373, 0.00390625
          %v382 = vmul.f32 %v374, 0.00390625
          %v383 = vmul.f32 %v375, 0.00390625
          %v384 = vmul.f32 %v376, 0.00390625
          %v385 = vmul.f32 %v377, 0.00390625
          %v386 = vmul.f32 %v378, 0.00390625
          %v387 = vld [vmem:[#allocation3] sm:$0xff]
          %v388 = vld [vmem:[#allocation3 + $0x8] sm:$0xff]
          %v389 = vld [vmem:[#allocation3 + $0x10] sm:$0xff]
          %v390 = vld [vmem:[#allocation3 + $0x18] sm:$0xff]
          %v391 = vld [vmem:[#allocation3 + $0x20] sm:$0xff]
          %v392 = vld [vmem:[#allocation3 + $0x28] sm:$0xff]
          %v393 = vld [vmem:[#allocation3 + $0x30] sm:$0xff]
          %v394 = vld [vmem:[#allocation3 + $0x38] sm:$0xff]
          %396 = vset.pattern.permute.xlu0 0
          %397 = vperm.xlu0 %396, %v379
          %v398 = vpop.permute.xlu0 %397
          %401 = vset.pattern.permute.xlu0 0
          %402 = vperm.xlu0 %401, %v380
          %v403 = vpop.permute.xlu0 %402
          %406 = vset.pattern.permute.xlu0 0
          %407 = vperm.xlu0 %406, %v381
          %v408 = vpop.permute.xlu0 %407
          %411 = vset.pattern.permute.xlu0 0
          %412 = vperm.xlu0 %411, %v382
          %v413 = vpop.permute.xlu0 %412
          %416 = vset.pattern.permute.xlu0 0
          %417 = vperm.xlu0 %416, %v383
          %v418 = vpop.permute.xlu0 %417
          %421 = vset.pattern.permute.xlu0 0
          %422 = vperm.xlu0 %421, %v384
          %v423 = vpop.permute.xlu0 %422
          %426 = vset.pattern.permute.xlu0 0
          %427 = vperm.xlu0 %426, %v385
          %v428 = vpop.permute.xlu0 %427
          %431 = vset.pattern.permute.xlu0 0
          %432 = vperm.xlu0 %431, %v386
          %v433 = vpop.permute.xlu0 %432
          %436 = vset.pattern.permute.xlu0 0
          %437 = vperm.xlu0 %436, %v387
          %v438 = vpop.permute.xlu0 %437
          %441 = vset.pattern.permute.xlu0 0
          %442 = vperm.xlu0 %441, %v388
          %v443 = vpop.permute.xlu0 %442
          %446 = vset.pattern.permute.xlu0 0
          %447 = vperm.xlu0 %446, %v389
          %v448 = vpop.permute.xlu0 %447
          %451 = vset.pattern.permute.xlu0 0
          %452 = vperm.xlu0 %451, %v390
          %v453 = vpop.permute.xlu0 %452
          %456 = vset.pattern.permute.xlu0 0
          %457 = vperm.xlu0 %456, %v391
          %v458 = vpop.permute.xlu0 %457
          %461 = vset.pattern.permute.xlu0 0
          %462 = vperm.xlu0 %461, %v392
          %v463 = vpop.permute.xlu0 %462
          %466 = vset.pattern.permute.xlu0 0
          %467 = vperm.xlu0 %466, %v393
          %v468 = vpop.permute.xlu0 %467
          %471 = vset.pattern.permute.xlu0 0
          %472 = vperm.xlu0 %471, %v394
          %v473 = vpop.permute.xlu0 %472
          %v475 = vsel %vm370, %v398, %v438
          %v476 = vsel %vm370, %v403, %v443
          %v477 = vsel %vm370, %v408, %v448
          %v478 = vsel %vm370, %v413, %v453
          %v479 = vsel %vm370, %v418, %v458
          %v480 = vsel %vm370, %v423, %v463
          %v481 = vsel %vm370, %v428, %v468
          %v482 = vsel %vm370, %v433, %v473
          %v483 = vld [vmem:[%s1] sm:$0xf]
          %vm484 = vcmask 523264
          %v486 = vsel %vm484, %v483, 0
          %488 = vmatpush.msra.mxu0 0.0
          %489 = vmatpush.msra.mxu0 0.0
          %490 = vmatpush.msra.mxu0 0.0
          %491 = vmatpush.msra.mxu0 0.0
          %492 = vmatpush.msra.mxu0 0.0
          %493 = vmatpush.msra.mxu0 0.0
          %494 = vmatpush.msra.mxu0 0.0
          %495 = vmatpush.msra.mxu0 0.0
          %496 = vmatpush.msra.mxu0 %v482
          %497 = vmatpush.msra.mxu0 %v481
          %498 = vmatpush.msra.mxu0 %v480
          %499 = vmatpush.msra.mxu0 %v479
          %500 = vmatpush.msra.mxu0 %v478
          %501 = vmatpush.msra.mxu0 %v477
          %502 = vmatpush.msra.mxu0 %v476
          %503 = vmatpush.msra.mxu0 %v475
          %504 = vmatmul.f32.gmra.mxu0 %v486
          %v505 = vpop.f32.mrf.mxu0
          %v506 = vadd.f32 0.0, %v505
          %507 = vdwg.mxu0
          %v508 = vmax.f32 %v506, 0.0
          %v509 = vld [vmem:[%s2] sm:$0xff]
          %v510 = vld [vmem:[%s2 + $0x8] sm:$0xff]
          %v511 = vld [vmem:[%s2 + $0x10] sm:$0xff]
          %v512 = vld [vmem:[%s2 + $0x18] sm:$0xff]
          %v513 = vld [vmem:[%s2 + $0x20] sm:$0xff]
          %v514 = vld [vmem:[%s2 + $0x28] sm:$0xff]
          %v515 = vld [vmem:[%s2 + $0x30] sm:$0xff]
          %v516 = vld [vmem:[%s2 + $0x38] sm:$0xff]
          %vm517 = vcmask 31744
          %v519 = vsel %vm517, %v509, 0
          %v522 = vsel %vm517, %v510, 0
          %v525 = vsel %vm517, %v511, 0
          %v528 = vsel %vm517, %v512, 0
          %v531 = vsel %vm517, %v513, 0
          %v534 = vsel %vm517, %v514, 0
          %v537 = vsel %vm517, %v515, 0
          %v540 = vsel %vm517, %v516, 0
          %vm542 = vcmask 1043456
          %v544 = vsel %vm542, %v508, 0
          %546 = vmatpush.msra.mxu0 0.0
          %547 = vmatpush.msra.mxu0 0.0
          %548 = vmatpush.msra.mxu0 0.0
          %549 = vmatpush.msra.mxu0 0.0
          %550 = vmatpush.msra.mxu0 0.0
          %551 = vmatpush.msra.mxu0 0.0
          %552 = vmatpush.msra.mxu0 0.0
          %553 = vmatpush.msra.mxu0 0.0
          %554 = vmatpush.msra.mxu0 0.0
          %555 = vmatpush.msra.mxu0 0.0
          %556 = vmatpush.msra.mxu0 0.0
          %557 = vmatpush.msra.mxu0 0.0
          %558 = vmatpush.msra.mxu0 0.0
          %559 = vmatpush.msra.mxu0 0.0
          %560 = vmatpush.msra.mxu0 0.0
          %561 = vmatpush.msra.mxu0 %v544
          %562 = vmatmul.f32.gmra.mxu0 %v519
          %v563 = vpop.f32.mrf.mxu0
          %v564 = vadd.f32 0.0, %v563
          %565 = vmatmul.f32.gmra.mxu0 %v522
          %v566 = vpop.f32.mrf.mxu0
          %v567 = vadd.f32 0.0, %v566
          %568 = vmatmul.f32.gmra.mxu0 %v525
          %v569 = vpop.f32.mrf.mxu0
          %v570 = vadd.f32 0.0, %v569
          %571 = vmatmul.f32.gmra.mxu0 %v528
          %v572 = vpop.f32.mrf.mxu0
          %v573 = vadd.f32 0.0, %v572
          %574 = vmatmul.f32.gmra.mxu0 %v531
          %v575 = vpop.f32.mrf.mxu0
          %v576 = vadd.f32 0.0, %v575
          %577 = vmatmul.f32.gmra.mxu0 %v534
          %v578 = vpop.f32.mrf.mxu0
          %v579 = vadd.f32 0.0, %v578
          %580 = vmatmul.f32.gmra.mxu0 %v537
          %v581 = vpop.f32.mrf.mxu0
          %v582 = vadd.f32 0.0, %v581
          %583 = vmatmul.f32.gmra.mxu0 %v540
          %v584 = vpop.f32.mrf.mxu0
          %v585 = vadd.f32 0.0, %v584
          %586 = vdwg.mxu0
          %595 = vrot.lane.b32.xlu0 %v564, 127
          %v596 = vpop.permute.xlu0 %595
          %597 = vrot.lane.b32.xlu0 %v567, 127
          %v598 = vpop.permute.xlu0 %597
          %599 = vrot.lane.b32.xlu0 %v570, 127
          %v600 = vpop.permute.xlu0 %599
          %601 = vrot.lane.b32.xlu0 %v573, 127
          %v602 = vpop.permute.xlu0 %601
          %603 = vrot.lane.b32.xlu0 %v576, 127
          %v604 = vpop.permute.xlu0 %603
          %605 = vrot.lane.b32.xlu0 %v579, 127
          %v606 = vpop.permute.xlu0 %605
          %607 = vrot.lane.b32.xlu0 %v582, 127
          %v608 = vpop.permute.xlu0 %607
          %609 = vrot.lane.b32.xlu0 %v585, 127
          %v610 = vpop.permute.xlu0 %609
          %v619 = vadd.f32 %v564, %v596
          %v620 = vadd.f32 %v567, %v598
          %v621 = vadd.f32 %v570, %v600
          %v622 = vadd.f32 %v573, %v602
          %v623 = vadd.f32 %v576, %v604
          %v624 = vadd.f32 %v579, %v606
          %v625 = vadd.f32 %v582, %v608
          %v626 = vadd.f32 %v585, %v610
          %v627 = vxor.u32 %v619, 2147483648
          %v628 = vxor.u32 %v620, 2147483648
          %v629 = vxor.u32 %v621, 2147483648
          %v630 = vxor.u32 %v622, 2147483648
          %v631 = vxor.u32 %v623, 2147483648
          %v632 = vxor.u32 %v624, 2147483648
          %v633 = vxor.u32 %v625, 2147483648
          %v634 = vxor.u32 %v626, 2147483648
          %v635 = vmul.f32 %v627, 1.442695
          %v636 = vpow.pop %v635
          %v637 = vmul.f32 %v628, 1.442695
          %v638 = vpow.pop %v637
          %v639 = vmul.f32 %v629, 1.442695
          %v640 = vpow.pop %v639
          %v641 = vmul.f32 %v630, 1.442695
          %v642 = vpow.pop %v641
          %v643 = vmul.f32 %v631, 1.442695
          %v644 = vpow.pop %v643
          %v645 = vmul.f32 %v632, 1.442695
          %v646 = vpow.pop %v645
          %v647 = vmul.f32 %v633, 1.442695
          %v648 = vpow.pop %v647
          %v649 = vmul.f32 %v634, 1.442695
          %v650 = vpow.pop %v649
          %v651 = vadd.f32 %v636, 1.0
          %v652 = vadd.f32 %v638, 1.0
          %v653 = vadd.f32 %v640, 1.0
          %v654 = vadd.f32 %v642, 1.0
          %v655 = vadd.f32 %v644, 1.0
          %v656 = vadd.f32 %v646, 1.0
          %v657 = vadd.f32 %v648, 1.0
          %v658 = vadd.f32 %v650, 1.0
          %v659 = vrcp.pop %v651
          %v660 = vmul.f32 %v651, %v659
          %v661 = vsub.f32 1.0, %v660
          %v662 = vmul.f32 %v659, %v661
          %v663 = vadd.f32 %v659, %v662
          %vm664 = vweird.f32 %v651
          %vm665 = vweird.f32 %v659
          %vm666 = vmor %vm664, %vm665
          %v667 = vsel %vm666, %v659, %v663
          %v668 = vand.u32 2147483647, %v651
          %vm669 = vcmp.eq.f32.partialorder %v668, 8.507059e+37
          %v670 = vand.u32 %v651, 2147483648
          %v671 = vor.u32 1.1754944e-38, %v670
          %v672 = vsel %vm669, %v671, %v667
          %v673 = vmul.f32 1.0, %v672
          %v674 = vrcp.pop %v652
          %v675 = vmul.f32 %v652, %v674
          %v676 = vsub.f32 1.0, %v675
          %v677 = vmul.f32 %v674, %v676
          %v678 = vadd.f32 %v674, %v677
          %vm679 = vweird.f32 %v652
          %vm680 = vweird.f32 %v674
          %vm681 = vmor %vm679, %vm680
          %v682 = vsel %vm681, %v674, %v678
          %v683 = vand.u32 2147483647, %v652
          %vm684 = vcmp.eq.f32.partialorder %v683, 8.507059e+37
          %v685 = vand.u32 %v652, 2147483648
          %v686 = vor.u32 1.1754944e-38, %v685
          %v687 = vsel %vm684, %v686, %v682
          %v688 = vmul.f32 1.0, %v687
          %v689 = vrcp.pop %v653
          %v690 = vmul.f32 %v653, %v689
          %v691 = vsub.f32 1.0, %v690
          %v692 = vmul.f32 %v689, %v691
          %v693 = vadd.f32 %v689, %v692
          %vm694 = vweird.f32 %v653
          %vm695 = vweird.f32 %v689
          %vm696 = vmor %vm694, %vm695
          %v697 = vsel %vm696, %v689, %v693
          %v698 = vand.u32 2147483647, %v653
          %vm699 = vcmp.eq.f32.partialorder %v698, 8.507059e+37
          %v700 = vand.u32 %v653, 2147483648
          %v701 = vor.u32 1.1754944e-38, %v700
          %v702 = vsel %vm699, %v701, %v697
          %v703 = vmul.f32 1.0, %v702
          %v704 = vrcp.pop %v654
          %v705 = vmul.f32 %v654, %v704
          %v706 = vsub.f32 1.0, %v705
          %v707 = vmul.f32 %v704, %v706
          %v708 = vadd.f32 %v704, %v707
          %vm709 = vweird.f32 %v654
          %vm710 = vweird.f32 %v704
          %vm711 = vmor %vm709, %vm710
          %v712 = vsel %vm711, %v704, %v708
          %v713 = vand.u32 2147483647, %v654
          %vm714 = vcmp.eq.f32.partialorder %v713, 8.507059e+37
          %v715 = vand.u32 %v654, 2147483648
          %v716 = vor.u32 1.1754944e-38, %v715
          %v717 = vsel %vm714, %v716, %v712
          %v718 = vmul.f32 1.0, %v717
          %v719 = vrcp.pop %v655
          %v720 = vmul.f32 %v655, %v719
          %v721 = vsub.f32 1.0, %v720
          %v722 = vmul.f32 %v719, %v721
          %v723 = vadd.f32 %v719, %v722
          %vm724 = vweird.f32 %v655
          %vm725 = vweird.f32 %v719
          %vm726 = vmor %vm724, %vm725
          %v727 = vsel %vm726, %v719, %v723
          %v728 = vand.u32 2147483647, %v655
          %vm729 = vcmp.eq.f32.partialorder %v728, 8.507059e+37
          %v730 = vand.u32 %v655, 2147483648
          %v731 = vor.u32 1.1754944e-38, %v730
          %v732 = vsel %vm729, %v731, %v727
          %v733 = vmul.f32 1.0, %v732
          %v734 = vrcp.pop %v656
          %v735 = vmul.f32 %v656, %v734
          %v736 = vsub.f32 1.0, %v735
          %v737 = vmul.f32 %v734, %v736
          %v738 = vadd.f32 %v734, %v737
          %vm739 = vweird.f32 %v656
          %vm740 = vweird.f32 %v734
          %vm741 = vmor %vm739, %vm740
          %v742 = vsel %vm741, %v734, %v738
          %v743 = vand.u32 2147483647, %v656
          %vm744 = vcmp.eq.f32.partialorder %v743, 8.507059e+37
          %v745 = vand.u32 %v656, 2147483648
          %v746 = vor.u32 1.1754944e-38, %v745
          %v747 = vsel %vm744, %v746, %v742
          %v748 = vmul.f32 1.0, %v747
          %v749 = vrcp.pop %v657
          %v750 = vmul.f32 %v657, %v749
          %v751 = vsub.f32 1.0, %v750
          %v752 = vmul.f32 %v749, %v751
          %v753 = vadd.f32 %v749, %v752
          %vm754 = vweird.f32 %v657
          %vm755 = vweird.f32 %v749
          %vm756 = vmor %vm754, %vm755
          %v757 = vsel %vm756, %v749, %v753
          %v758 = vand.u32 2147483647, %v657
          %vm759 = vcmp.eq.f32.partialorder %v758, 8.507059e+37
          %v760 = vand.u32 %v657, 2147483648
          %v761 = vor.u32 1.1754944e-38, %v760
          %v762 = vsel %vm759, %v761, %v757
          %v763 = vmul.f32 1.0, %v762
          %v764 = vrcp.pop %v658
          %v765 = vmul.f32 %v658, %v764
          %v766 = vsub.f32 1.0, %v765
          %v767 = vmul.f32 %v764, %v766
          %v768 = vadd.f32 %v764, %v767
          %vm769 = vweird.f32 %v658
          %vm770 = vweird.f32 %v764
          %vm771 = vmor %vm769, %vm770
          %v772 = vsel %vm771, %v764, %v768
          %v773 = vand.u32 2147483647, %v658
          %vm774 = vcmp.eq.f32.partialorder %v773, 8.507059e+37
          %v775 = vand.u32 %v658, 2147483648
          %v776 = vor.u32 1.1754944e-38, %v775
          %v777 = vsel %vm774, %v776, %v772
          %v778 = vmul.f32 1.0, %v777
          %vm779 = vcmask 7168
          %780 = vst.msk [vmem:[%s249] sm:$0xff] %vm779, %v673
          %781 = vst.msk [vmem:[%s249 + $0x8] sm:$0xff] %vm779, %v688
          %782 = vst.msk [vmem:[%s249 + $0x10] sm:$0xff] %vm779, %v703
          %783 = vst.msk [vmem:[%s249 + $0x18] sm:$0xff] %vm779, %v718
          %784 = vst.msk [vmem:[%s249 + $0x20] sm:$0xff] %vm779, %v733
          %785 = vst.msk [vmem:[%s249 + $0x28] sm:$0xff] %vm779, %v748
          %786 = vst.msk [vmem:[%s249 + $0x30] sm:$0xff] %vm779, %v763
          %787 = vst.msk [vmem:[%s249 + $0x38] sm:$0xff] %vm779, %v778
        $region82: #{channel_attention.2} parent=65 // pred_fallthru
          _
        %p788 = scmp.lt.s32.totalorder %s18, 1
        %s789 = scalar_select %p788, %s18, 1
        %s790 = smul.addr %s789, 8
        %s791 = smul.addr %s790, 8
        %s792 = scalar_lea.vmem %s3, %s791
        // Predicated region
        $region83: #{channel_attention.2} parent=65 // pred_check
          %p793 = pneg %p114
        $region84: #{channel_attention.2} parent=65 // pred_check_branch
          %795 = sbr.rel (%p793) target = $region86
        $region85: #{channel_attention.2} parent=65 // pred_region
          _
        $region86: #{channel_attention.2} parent=65 // pred_fallthru
          _
      $region66: #{channel_attention.2} parent=5 // pred_fallthru
        _
      %p796 = scmp.le.s32.totalorder 2, %s9
      // Predicated region
      $region87: #{channel_attention.2} parent=5 // pred_check
        %p797 = pneg %p796
      $region88: #{channel_attention.2} parent=5 // pred_check_branch
        %799 = sbr.rel (%p797) target = $region90
      $region89: #{channel_attention.2} parent=5 // pred_region
        %s800 = ssub.s32 %s9, 2
        // Predicated region
        $region91: #{channel_attention.2} parent=89 // pred_check
          %p801 = pneg %p120
        $region92: #{channel_attention.2} parent=89 // pred_check_branch
          %803 = sbr.rel (%p801) target = $region94
        $region93: #{channel_attention.2} parent=89 // pred_region
          %p804 = scmp.lt.s32.totalorder %s20, 1
          %s805 = scalar_select %p804, %s20, 1
          %s806 = smul.addr %s805, 8
          %s807 = smul.addr %s806, 8
          %s808 = scalar_lea.vmem %s3, %s807
        $region94: #{channel_attention.2} parent=89 // pred_fallthru
          _
      $region90: #{channel_attention.2} parent=5 // pred_fallthru
        _
    $region6: #{channel_attention.2} parent=1 // loop_footer
      %s13 = sadd.s32 1, %s9
    $region7: #{channel_attention.2} parent=1 // loop_footer_branch
      %8 = sbr.rel target = $region3
    $region8: #{channel_attention.2} parent=1 // loop_exit
      _

</llo_original>
